<compile_context>
chip_gen: v7x
topology: tpu7x:2x2x1
jax: 0.10.0
libtpu: 0.0.40
codegen_flags: <defaults>
</compile_context>

<pallas_src>
import functools
import math

import jax
import jax.numpy as jnp
import numpy as np
from jax.experimental import pallas as pl
from jax.experimental.pallas import tpu as pltpu


# ----------------------------------------------------------------------------- kernel
def _dmdc_kernel(planes_ref, w_ref, b_ref, out_ref, *, dil, trb, wout, cin3, par_pos):
    """out = sum_kh  W[kh] @ planes[parity(kh)][row-shift(kh) window]  + b."""
    span = trb * wout
    acc = None
    for kh in range(3):                                   # static unroll (3 taps rows)
        rsh = (kh * dil) // 2                             # row shift inside haloed block
        ip = par_pos[(kh * dil) % 2]                      # which row-parity plane
        rows = planes_ref[0, 0,
                          ip * cin3:(ip + 1) * cin3,
                          rsh * wout: rsh * wout + span]  # (3*cin, trb*wout) bf16
        part = jnp.dot(w_ref[0, kh], rows, preferred_element_type=jnp.float32)
        acc = part if acc is None else acc + part
    out_ref[0] = (acc + b_ref[0]).astype(out_ref.dtype)


# ----------------------------------------------------------------------------- helpers
def _cdiv(a, b):
    return -(-a // b)


def _round_up(a, b):
    return _cdiv(a, b) * b


def _pick_row_block(hout, wout, cin, cout, n_par, dil, n_batch):
    """Output rows per grid step, from an explicit VMEM budget + lane-density rule."""
    # out block's last dim (trb*wout) must be a multiple of 128 unless it spans the axis.
    step = 128 // math.gcd(wout, 128)
    # ~12 MiB for the double-buffered in/out blocks: fits v5e's 16 MiB scoped default
    # and is far under v7x's 64 MiB physical VMEM.
    budget = 12 * 1024 * 1024
    row_bytes = n_par * 3 * cin * wout * 2 + cout * wout * 4        # bf16 in + f32 out
    halo_bytes = n_par * 3 * cin * dil * wout * 2
    rows_budget = max(step, (budget // 2 - 2 * halo_bytes) // max(1, 2 * row_bytes))
    if rows_budget >= hout and n_batch >= 2:
        return hout, 1                    # whole image per step; batch feeds both v7x cores
    trb = max(step, (rows_budget // step) * step)
    if n_batch < 2:                       # v7x megacore: expose >= 2 parallel steps
        trb = min(trb, max(step, _round_up(_cdiv(hout, 2), step)))
    trb = min(trb, _round_up(hout, step))
    return trb, _cdiv(hout, trb)


# ----------------------------------------------------------------------------- forward
def dmdc_forward(x, params, dilation):
    n, cin, h, w = x.shape
    d = int(dilation)
    mid = cin // 2
    cout = params["wo"].shape[0]
    assert h % 2 == 0 and w % 2 == 0, "stride-2 path assumes even spatial dims"
    assert h % d == 0 and w % d == 0, "adaptive-pool path assumes divisible spatial dims"
    # TODO(synk): PyTorch AdaptiveAvgPool2d also handles H % d != 0; unsupported here.
    hout, wout = h // 2, w // 2
    f32, bf16 = jnp.float32, jnp.bfloat16

    # ---- fold the three DMDConv convs (no nonlinearity between them) --------------
    w1 = params["w1"]                                     # (cin, cin, 3, 3) = (O, I, kh, kw)
    w2m = params["w2"].reshape(mid, cin)
    w3m = params["w3"].reshape(mid, mid)
    w32 = w3m @ w2m                                       # (mid, cin)
    wfold = jnp.einsum("mo,oihw->mhwi", w32, w1).reshape(mid, 9 * cin)   # cols = (kh, kw, c)
    bfold = w32 @ params["b1"] + w3m @ params["b2"] + params["b3"]       # (mid,)

    # ---- DMDCPool gate: d*d*cin pooled scalars -> per-batch (mid,) vector ----------
    pooled = x.reshape(n, cin, d, h // d, d, w // d).mean(axis=(3, 5))   # (n, cin, d, d)
    wp1m = params["wp1"].reshape(mid, cin)
    p1 = jnp.einsum("mc,ncij->nmij", wp1m, pooled) + params["bp1"][None, :, None, None]
    gate = jnp.einsum("moij,noij->nm", params["wp2"], p1) + params["bp2"][None, :]   # (n, mid)

    # ---- fold gate + Out_conv into one per-batch weight ----------------------------
    wo = params["wo"].reshape(cout, mid)
    wog = wo[None] * gate[:, None, :]                                     # (n, cout, mid)
    wcomb = jnp.einsum("ncm,mk->nck", wog, wfold)                         # (n, cout, 9*cin)
    bcomb = jnp.einsum("ncm,m->nc", wog, bfold) + params["bo"][None, :]   # (n, cout)
    wcomb = wcomb.reshape(n, cout, 3, 3 * cin).transpose(0, 2, 1, 3).astype(bf16)  # (n,3,cout,3cin)
    bcomb = bcomb.reshape(n, cout, 1).astype(f32)

    # ---- bf16 "kw-tap x row-parity" planes, blocked over output rows with a halo ---
    pars = sorted({(kh * d) % 2 for kh in range(3)})      # [0] (even d) or [0, 1] (odd d)
    par_pos = {p: i for i, p in enumerate(pars)}
    n_par = len(pars)

    trb, n_rb = _pick_row_block(hout, wout, cin, cout, n_par, d, n)
    hout_pad = trb * n_rb
    span_in = (trb + d) * wout
    span_out = trb * wout

    xb = x.astype(bf16)
    xp = jnp.pad(xb, ((0, 0), (0, 0), (d, d + 2 * (hout_pad - hout)), (d, d)))
    blocks = []
    for q in range(n_rb):
        per_p = []
        for p in pars:
            r0 = 2 * q * trb + p
            rows = xp[:, :, r0: r0 + 2 * (trb + d): 2, :]                 # (n, cin, trb+d, W+2d)
            taps = jnp.stack(
                [rows[:, :, :, kw * d: kw * d + 2 * wout: 2] for kw in range(3)],
                axis=1)                                                   # (n, 3, cin, trb+d, wout)
            per_p.append(taps.reshape(n, 3 * cin, span_in))
        blocks.append(jnp.stack(per_p, axis=1).reshape(n, n_par * 3 * cin, span_in))
    planes = jnp.stack(blocks, axis=1)                    # (n, n_rb, n_par*3*cin, (trb+d)*wout)

    # ---- pallas call ----------------------------------------------------------------
    in_block = n_par * 3 * cin * span_in * 2
    out_block = cout * span_out * 4
    vmem_limit = int(min(40 << 20, max(16 << 20, int(3.2 * (in_block + out_block)) + (2 << 20))))
    cost = pl.CostEstimate(
        flops=2 * n * cout * 9 * cin * hout_pad * wout,
        transcendentals=0,
        bytes_accessed=int(planes.size * planes.dtype.itemsize
                           + wcomb.size * wcomb.dtype.itemsize
                           + bcomb.size * bcomb.dtype.itemsize
                           + n * cout * hout_pad * wout * 4))

    kernel = functools.partial(_dmdc_kernel, dil=d, trb=trb, wout=wout,
                               cin3=3 * cin, par_pos=par_pos)

    out_flat = pl.pallas_call(
        kernel,
        out_shape=jax.ShapeDtypeStruct((n, cout, hout_pad * wout), f32),
        grid=(n, n_rb),
        in_specs=[
            pl.BlockSpec((1, 1, n_par * 3 * cin, span_in), lambda b, q: (b, q, 0, 0)),
            pl.BlockSpec((1, 3, cout, 3 * cin), lambda b, q: (b, 0, 0, 0)),
            pl.BlockSpec((1, cout, 1), lambda b, q: (b, 0, 0)),
        ],
        out_specs=pl.BlockSpec((1, cout, span_out), lambda b, q: (b, 0, q)),
        compiler_params=pltpu.CompilerParams(
            dimension_semantics=("parallel", "parallel"),
            vmem_limit_bytes=vmem_limit),
        cost_estimate=cost,
    )(planes, wcomb, bcomb)

    out = out_flat[:, :, :hout * wout] if hout_pad != hout else out_flat
    return out.reshape(n, cout, hout, wout)


# ----------------------------------------------------------------------------- reference
def init_params(key, cin, cout, d):
    mid = cin // 2
    ks = jax.random.split(key, 12)

    def w(k, shape):
        return 0.1 * jax.random.normal(k, shape, jnp.float32)

    return dict(
        w1=w(ks[0], (cin, cin, 3, 3)),   b1=w(ks[1], (cin,)),
        w2=w(ks[2], (mid, cin, 1, 1)),   b2=w(ks[3], (mid,)),
        w3=w(ks[4], (mid, mid, 1, 1)),   b3=w(ks[5], (mid,)),
        wp1=w(ks[6], (mid, cin, 1, 1)),  bp1=w(ks[7], (mid,)),
        wp2=w(ks[8], (mid, mid, d, d)),  bp2=w(ks[9], (mid,)),
        wo=w(ks[10], (cout, mid, 1, 1)), bo=w(ks[11], (cout,)),
    )


def dmdc_reference(x, params, d):
    """Pure-JAX reference reproducing the PyTorch module semantics."""
    def conv(x, w, b, stride=1, padding=0, dilation=1):
        y = jax.lax.conv_general_dilated(
            x, w, window_strides=(stride, stride),
            padding=[(padding, padding), (padding, padding)],
            rhs_dilation=(dilation, dilation),
            dimension_numbers=("NCHW", "OIHW", "NCHW"))
        return y + b[None, :, None, None]

    x1 = conv(x, params["w1"], params["b1"], stride=2, padding=d, dilation=d)
    x1 = conv(x1, params["w2"], params["b2"])
    x1 = conv(x1, params["w3"], params["b3"])
    n, c, h, w = x.shape
    p = x.reshape(n, c, d, h // d, d, w // d).mean(axis=(3, 5))
    p = conv(p, params["wp1"], params["bp1"])
    p = conv(p, params["wp2"], params["bp2"])
    return conv(x1 * p, params["wo"], params["bo"])


# ----------------------------------------------------------------------------- main
if __name__ == "__main__":
    key = jax.random.PRNGKey(0)
    k1, k2, k3, k4 = jax.random.split(key, 4)

    fwd = jax.jit(dmdc_forward, static_argnums=2)

    # Case 1: even dilation (single row-parity plane set); batch=2 feeds both v7x cores.
    n, cin, cout, d, hw = 2, 8, 8, 2, 32
    x = jax.random.normal(k1, (n, cin, hw, hw), jnp.float32)
    params = init_params(k2, cin, cout, d)
    out = jax.block_until_ready(fwd(x, params, d))
    ref = dmdc_reference(x, params, d)
    assert out.shape == (n, cout, hw // 2, hw // 2)
    np.testing.assert_allclose(np.asarray(out), np.asarray(ref), rtol=1e-2, atol=2e-3)

    # Case 2: odd dilation (two row-parity plane sets); batch=1 -> two row blocks (megacore).
    n, cin, cout, d, hw = 1, 8, 4, 3, 48
    x = jax.random.normal(k3, (n, cin, hw, hw), jnp.float32)
    params = init_params(k4, cin, cout, d)
    out = jax.block_until_ready(fwd(x, params, d))
    ref = dmdc_reference(x, params, d)
    assert out.shape == (n, cout, hw // 2, hw // 2)
    np.testing.assert_allclose(np.asarray(out), np.asarray(ref), rtol=1e-2, atol=2e-3)

    print("KERNEL_OK")
</pallas_src>

<mosaic_0001>
module attributes {stable_mosaic.version = 11 : i64} {
  func.func @_dmdc_kernel(%arg0: i32, %arg1: i32, %arg2: memref<1x1x24x288xbf16, #tpu.memory_space<vmem>>, %arg3: memref<1x3x8x24xbf16, #tpu.memory_space<vmem>>, %arg4: memref<1x8x1xf32, #tpu.memory_space<vmem>>, %arg5: memref<1x8x256xf32, #tpu.memory_space<vmem>>) attributes {dimension_semantics = [#tpu.dimension_semantics<parallel>, #tpu.dimension_semantics<parallel>], iteration_bounds = array<i64: 2, 1>, scalar_prefetch = 0 : i64, scratch_operands = 0 : i64, tpu.core_type = #tpu.core_type<tc>, window_params = [{transform_indices = @transform_0, window_bounds = array<i64: 1, 1, 24, 288>}, {transform_indices = @transform_1, window_bounds = array<i64: 1, 3, 8, 24>}, {transform_indices = @transform_2, window_bounds = array<i64: 1, 8, 1>}, {transform_indices = @transform_3, window_bounds = array<i64: 1, 8, 256>}]} {
    %c0 = arith.constant 0 : index
    %c0_0 = arith.constant 0 : index
    %c0_1 = arith.constant 0 : index
    %c0_2 = arith.constant 0 : index
    %0 = vector.load %arg2[%c0, %c0_0, %c0_1, %c0_2] : memref<1x1x24x288xbf16, #tpu.memory_space<vmem>>, vector<1x1x24x256xbf16>
    %1 = vector.shape_cast %0 : vector<1x1x24x256xbf16> to vector<24x256xbf16>
    %c0_3 = arith.constant 0 : index
    %c0_4 = arith.constant 0 : index
    %c0_5 = arith.constant 0 : index
    %c0_6 = arith.constant 0 : index
    %2 = vector.load %arg3[%c0_3, %c0_4, %c0_5, %c0_6] : memref<1x3x8x24xbf16, #tpu.memory_space<vmem>>, vector<1x1x8x24xbf16>
    %3 = vector.shape_cast %2 : vector<1x1x8x24xbf16> to vector<8x24xbf16>
    %cst = arith.constant dense<0.000000e+00> : vector<8x256xf32>
    %4 = tpu.matmul %3, %1, %cst {dimension_numbers = #tpu.dot_dimension_numbers<[1], [0], [0], [1], [0, 0, 1, 1], [], []>} : vector<8x24xbf16>, vector<24x256xbf16>, vector<8x256xf32> -> vector<8x256xf32>
    %c0_7 = arith.constant 0 : index
    %c0_8 = arith.constant 0 : index
    %c0_9 = arith.constant 0 : index
    %c16 = arith.constant 16 : index
    %5 = vector.load %arg2[%c0_7, %c0_8, %c0_9, %c16] : memref<1x1x24x288xbf16, #tpu.memory_space<vmem>>, vector<1x1x24x256xbf16>
    %6 = vector.shape_cast %5 : vector<1x1x24x256xbf16> to vector<24x256xbf16>
    %c0_10 = arith.constant 0 : index
    %c1 = arith.constant 1 : index
    %c0_11 = arith.constant 0 : index
    %c0_12 = arith.constant 0 : index
    %7 = vector.load %arg3[%c0_10, %c1, %c0_11, %c0_12] : memref<1x3x8x24xbf16, #tpu.memory_space<vmem>>, vector<1x1x8x24xbf16>
    %8 = vector.shape_cast %7 : vector<1x1x8x24xbf16> to vector<8x24xbf16>
    %cst_13 = arith.constant dense<0.000000e+00> : vector<8x256xf32>
    %9 = tpu.matmul %8, %6, %cst_13 {dimension_numbers = #tpu.dot_dimension_numbers<[1], [0], [0], [1], [0, 0, 1, 1], [], []>} : vector<8x24xbf16>, vector<24x256xbf16>, vector<8x256xf32> -> vector<8x256xf32>
    %10 = arith.addf %4, %9 : vector<8x256xf32>
    %c0_14 = arith.constant 0 : index
    %c0_15 = arith.constant 0 : index
    %c0_16 = arith.constant 0 : index
    %c32 = arith.constant 32 : index
    %11 = vector.load %arg2[%c0_14, %c0_15, %c0_16, %c32] : memref<1x1x24x288xbf16, #tpu.memory_space<vmem>>, vector<1x1x24x256xbf16>
    %12 = vector.shape_cast %11 : vector<1x1x24x256xbf16> to vector<24x256xbf16>
    %c0_17 = arith.constant 0 : index
    %c2 = arith.constant 2 : index
    %c0_18 = arith.constant 0 : index
    %c0_19 = arith.constant 0 : index
    %13 = vector.load %arg3[%c0_17, %c2, %c0_18, %c0_19] : memref<1x3x8x24xbf16, #tpu.memory_space<vmem>>, vector<1x1x8x24xbf16>
    %14 = vector.shape_cast %13 : vector<1x1x8x24xbf16> to vector<8x24xbf16>
    %cst_20 = arith.constant dense<0.000000e+00> : vector<8x256xf32>
    %15 = tpu.matmul %14, %12, %cst_20 {dimension_numbers = #tpu.dot_dimension_numbers<[1], [0], [0], [1], [0, 0, 1, 1], [], []>} : vector<8x24xbf16>, vector<24x256xbf16>, vector<8x256xf32> -> vector<8x256xf32>
    %16 = arith.addf %10, %15 : vector<8x256xf32>
    %c0_21 = arith.constant 0 : index
    %c0_22 = arith.constant 0 : index
    %c0_23 = arith.constant 0 : index
    %17 = vector.load %arg4[%c0_21, %c0_22, %c0_23] : memref<1x8x1xf32, #tpu.memory_space<vmem>>, vector<1x8x1xf32>
    %18 = vector.shape_cast %17 : vector<1x8x1xf32> to vector<8x1xf32>
    %19 = vector.broadcast %18 : vector<8x1xf32> to vector<8x256xf32>
    %20 = arith.addf %16, %19 : vector<8x256xf32>
    %c0_24 = arith.constant 0 : index
    %c0_25 = arith.constant 0 : index
    %c0_26 = arith.constant 0 : index
    %21 = vector.load %arg5[%c0_24, %c0_25, %c0_26] : memref<1x8x256xf32, #tpu.memory_space<vmem>>, vector<1x8x256xf32>
    %22 = vector.shape_cast %21 : vector<1x8x256xf32> to vector<8x256xf32>
    %23 = vector.shape_cast %20 : vector<8x256xf32> to vector<1x8x256xf32>
    tpu.vector_store %arg5[%c0_24, %c0_25, %c0_26], %23 {strides = array<i32>} : memref<1x8x256xf32, #tpu.memory_space<vmem>>, vector<1x8x256xf32>,
    return
  }
  func.func @transform_0(%arg0: i32, %arg1: i32) -> (i32, i32, i32, i32) {
    %c0_i32 = arith.constant 0 : i32
    %c0_i32_0 = arith.constant 0 : i32
    %c0_i32_1 = arith.constant 0 : i32
    return %arg0, %arg1, %c0_i32, %c0_i32_0 : i32, i32, i32, i32
  }
  func.func @transform_1(%arg0: i32, %arg1: i32) -> (i32, i32, i32, i32) {
    %c0_i32 = arith.constant 0 : i32
    %c0_i32_0 = arith.constant 0 : i32
    %c0_i32_1 = arith.constant 0 : i32
    %c0_i32_2 = arith.constant 0 : i32
    return %arg0, %c0_i32, %c0_i32_0, %c0_i32_1 : i32, i32, i32, i32
  }
  func.func @transform_2(%arg0: i32, %arg1: i32) -> (i32, i32, i32) {
    %c0_i32 = arith.constant 0 : i32
    %c0_i32_0 = arith.constant 0 : i32
    %c0_i32_1 = arith.constant 0 : i32
    return %arg0, %c0_i32, %c0_i32_0 : i32, i32, i32
  }
  func.func @transform_3(%arg0: i32, %arg1: i32) -> (i32, i32, i32) {
    %c0_i32 = arith.constant 0 : i32
    %c0_i32_0 = arith.constant 0 : i32
    return %arg0, %c0_i32, %arg1 : i32, i32, i32
  }
}

</mosaic_0001>

<llo_original>
// kernel: dmdc_forward.1
$region0: #{dmdc_forward.1}
  #allocation0 [shape = 'u32[]', space=smem, size = 0x4, offset = 0x4, fixed_abs, tag = 'smem constant byte address 0x4 - core index']
  #allocation1 [shape = 'u32[144,128]{1,0:T(1,128)}', space=vmem, size = 0x12000, scoped, tag = 'internal scratch']
  %s0 = inlined_call_operand.vmem [shape: bf16[2,1,24,288], index: 0, kind: input, shape index: {}]
  %s1 = inlined_call_operand.vmem [shape: bf16[2,3,8,24], index: 1, kind: input, shape index: {}]
  %s2 = inlined_call_operand.vmem [shape: f32[2,8,1], index: 2, kind: input, shape index: {}]
  %s3 = inlined_call_operand.vmem [shape: f32[2,8,256], index: 3, kind: output, shape index: {}]
  %s4 = sld [smem:[#allocation0]]
  $region45: #{dmdc_forward.1} parent=0
    _
  %s6 = ssub.s32 1, %s4
  %s7 = scalar_select 0, %s6, %s4
  loop: start=0, step=1, limit=4
  $region2: #{dmdc_forward.1} parent=0 // loop_pre_header
    _
  $region3: #{dmdc_forward.1} parent=0 // loop_header
    %s9 = sphi 0, %s13
    %p10 = scmp.ge.s32.totalorder %s9, 4
    %s16 = sphi 0, %s28
    %s17 = sphi 0, %s24
    %s18 = sphi 0, %s16
    %s19 = sphi 0, %s17
    %s20 = sphi 0, %s18
    %s21 = sphi 0, %s19
    %s33 = sphi 0, %s35
    %s36 = sphi 0, %s33
    %s37 = sphi 0, %s36
    %s53 = sphi 0, %s37
    %s59 = sphi 0, %s61
    %s62 = sphi 0, %s59
    %s63 = sphi 0, %s62
    %s79 = sphi 0, %s63
    %s85 = sphi 0, %s87
    %s88 = sphi 0, %s85
    %s89 = sphi 0, %s88
    %s105 = sphi 0, %s89
    %s113 = sphi 0, %s115
    %s116 = sphi 0, %s113
    %s117 = sphi 0, %s116
    %s133 = sphi 0, %s117
  $region4: #{dmdc_forward.1} parent=0 // loop_header_branch
    %12 = sbr.rel (%p10) target = $region8
  $region5: #{dmdc_forward.1} parent=0 // loop_body
    %s14 = ssub.s32 %s9, 1
    %s15 = ssub.s32 %s9, 2
    %s22 = sadd.s32 1, %s17
    %p23 = scmp.ge.s32.totalorder %s22, 1
    %s24 = scalar_select %p23, 0, %s22
    %s25 = sadd.s32 1, %s16
    %s26 = scalar_select %p23, %s25, %s16
    %p27 = scmp.ge.s32.totalorder %s26, 2
    %s28 = scalar_select %p27, 0, %s26
    %s29 = ssub.s32 %s16, %s28
    %s30 = ssub.s32 %s17, %s24
    %s31 = sor.u32 %s29, %s30
    %p32 = scmp.eq.s32.totalorder %s31, 0
    %s34 = sadd.s32 %s33, 1
    %s35 = scalar_select %p32, %s33, %s34
    %p38 = pneg %p32
    %p39 = scmp.eq.s32.totalorder %s9, 1
    %p40 = por %p38, %p39
    %p41 = scmp.ne.s32.totalorder %s33, %s36
    %p42 = scmp.eq.s32.totalorder %s9, 0
    %p43 = por %p41, %p42
    %p44 = scmp.ne.s32.totalorder %s33, %s36
    %p45 = scmp.eq.s32.totalorder %s14, 1
    %p46 = por %p44, %p45
    %p47 = scmp.ne.s32.totalorder %s36, %s37
    %p48 = scmp.eq.s32.totalorder %s14, 0
    %p49 = por %p47, %p48
    %p50 = scmp.ne.s32.totalorder %s36, %s37
    %p51 = scmp.eq.s32.totalorder %s15, 1
    %p52 = por %p50, %p51
    %p54 = scmp.ne.s32.totalorder %s37, %s53
    %p55 = scmp.eq.s32.totalorder %s15, 0
    %p56 = por %p54, %p55
    %s57 = ssub.s32 %s16, %s28
    %p58 = scmp.eq.s32.totalorder %s57, 0
    %s60 = sadd.s32 %s59, 1
    %s61 = scalar_select %p58, %s59, %s60
    %p64 = pneg %p58
    %p65 = scmp.eq.s32.totalorder %s9, 1
    %p66 = por %p64, %p65
    %p67 = scmp.ne.s32.totalorder %s59, %s62
    %p68 = scmp.eq.s32.totalorder %s9, 0
    %p69 = por %p67, %p68
    %p70 = scmp.ne.s32.totalorder %s59, %s62
    %p71 = scmp.eq.s32.totalorder %s14, 1
    %p72 = por %p70, %p71
    %p73 = scmp.ne.s32.totalorder %s62, %s63
    %p74 = scmp.eq.s32.totalorder %s14, 0
    %p75 = por %p73, %p74
    %p76 = scmp.ne.s32.totalorder %s62, %s63
    %p77 = scmp.eq.s32.totalorder %s15, 1
    %p78 = por %p76, %p77
    %p80 = scmp.ne.s32.totalorder %s63, %s79
    %p81 = scmp.eq.s32.totalorder %s15, 0
    %p82 = por %p80, %p81
    %s83 = ssub.s32 %s16, %s28
    %p84 = scmp.eq.s32.totalorder %s83, 0
    %s86 = sadd.s32 %s85, 1
    %s87 = scalar_select %p84, %s85, %s86
    %p90 = pneg %p84
    %p91 = scmp.eq.s32.totalorder %s9, 1
    %p92 = por %p90, %p91
    %p93 = scmp.ne.s32.totalorder %s85, %s88
    %p94 = scmp.eq.s32.totalorder %s9, 0
    %p95 = por %p93, %p94
    %p96 = scmp.ne.s32.totalorder %s85, %s88
    %p97 = scmp.eq.s32.totalorder %s14, 1
    %p98 = por %p96, %p97
    %p99 = scmp.ne.s32.totalorder %s88, %s89
    %p100 = scmp.eq.s32.totalorder %s14, 0
    %p101 = por %p99, %p100
    %p102 = scmp.ne.s32.totalorder %s88, %s89
    %p103 = scmp.eq.s32.totalorder %s15, 1
    %p104 = por %p102, %p103
    %p106 = scmp.ne.s32.totalorder %s89, %s105
    %p107 = scmp.eq.s32.totalorder %s15, 0
    %p108 = por %p106, %p107
    %s109 = ssub.s32 %s16, %s28
    %s110 = ssub.s32 %s17, %s24
    %s111 = sor.u32 %s109, %s110
    %p112 = scmp.eq.s32.totalorder %s111, 0
    %s114 = sadd.s32 %s113, 1
    %s115 = scalar_select %p112, %s113, %s114
    %p118 = pneg %p112
    %p119 = scmp.eq.s32.totalorder %s9, 1
    %p120 = por %p118, %p119
    %p121 = scmp.ne.s32.totalorder %s113, %s116
    %p122 = scmp.eq.s32.totalorder %s9, 0
    %p123 = por %p121, %p122
    %p124 = scmp.ne.s32.totalorder %s113, %s116
    %p125 = scmp.eq.s32.totalorder %s14, 1
    %p126 = por %p124, %p125
    %p127 = scmp.ne.s32.totalorder %s116, %s117
    %p128 = scmp.eq.s32.totalorder %s14, 0
    %p129 = por %p127, %p128
    %p130 = scmp.ne.s32.totalorder %s116, %s117
    %p131 = scmp.eq.s32.totalorder %s15, 1
    %p132 = por %p130, %p131
    %p134 = scmp.ne.s32.totalorder %s117, %s133
    %p135 = scmp.eq.s32.totalorder %s15, 0
    %p136 = por %p134, %p135
    %p137 = scmp.le.s32.totalorder 1, %s9
    %p138 = scmp.lt.s32.totalorder %s9, 3
    %p139 = pnand %p137, %p138
    %p140 = pneg %p139
    // Predicated region
    $region9: #{dmdc_forward.1} parent=5 // pred_check
      _
    $region10: #{dmdc_forward.1} parent=5 // pred_check_branch
      %142 = sbr.rel (%p139) target = $region12
    $region11: #{dmdc_forward.1} parent=5 // pred_region
      %s143 = ssub.s32 %s9, 1
    $region12: #{dmdc_forward.1} parent=5 // pred_fallthru
      _
    %p144 = scmp.lt.s32.totalorder %s9, 2
    // Predicated region
    $region13: #{dmdc_forward.1} parent=5 // pred_check
      %p145 = pneg %p144
    $region14: #{dmdc_forward.1} parent=5 // pred_check_branch
      %147 = sbr.rel (%p145) target = $region16
    $region15: #{dmdc_forward.1} parent=5 // pred_region
      // Predicated region
      $region17: #{dmdc_forward.1} parent=15 // pred_check
        %p148 = pneg %p43
      $region18: #{dmdc_forward.1} parent=15 // pred_check_branch
        %150 = sbr.rel (%p148) target = $region20
      $region19: #{dmdc_forward.1} parent=15 // pred_region
        %p151 = scmp.lt.s32.totalorder %s16, 1
        %s152 = scalar_select %p151, %s16, 1
        %p153 = scmp.lt.s32.totalorder %s17, 0
        %s154 = scalar_select %p153, %s17, 0
        %s155 = smul.addr %s154, 9
        %s156 = smul.addr %s152, 9
        %s157 = sadd.s32 %s155, %s156
        %s158 = smul.addr %s157, 4
        %s159 = scalar_lea.vmem %s0, %s158
      $region20: #{dmdc_forward.1} parent=15 // pred_fallthru
        _
      // Predicated region
      $region21: #{dmdc_forward.1} parent=15 // pred_check
        %p160 = pneg %p69
      $region22: #{dmdc_forward.1} parent=15 // pred_check_branch
        %162 = sbr.rel (%p160) target = $region24
      $region23: #{dmdc_forward.1} parent=15 // pred_region
        %p163 = scmp.lt.s32.totalorder %s16, 1
        %s164 = scalar_select %p163, %s16, 1
        %s165 = smul.addr %s164, 3
        %s166 = smul.addr %s165, 4
        %s167 = scalar_lea.vmem %s1, %s166
      $region24: #{dmdc_forward.1} parent=15 // pred_fallthru
        _
      // Predicated region
      $region25: #{dmdc_forward.1} parent=15 // pred_check
        %p168 = pneg %p95
      $region26: #{dmdc_forward.1} parent=15 // pred_check_branch
        %170 = sbr.rel (%p168) target = $region28
      $region27: #{dmdc_forward.1} parent=15 // pred_region
        %p171 = scmp.lt.s32.totalorder %s16, 1
        %s172 = scalar_select %p171, %s16, 1
        %s173 = smul.addr %s172, 8
        %s174 = scalar_lea.vmem %s2, %s173
      $region28: #{dmdc_forward.1} parent=15 // pred_fallthru
        _
    $region16: #{dmdc_forward.1} parent=5 // pred_fallthru
      _
    %p175 = scmp.le.s32.totalorder 1, %s9
    %p176 = scmp.lt.s32.totalorder %s9, 3
    %p177 = pnand %p175, %p176
    %p178 = pneg %p177
    // Predicated region
    $region29: #{dmdc_forward.1} parent=5 // pred_check
      _
    $region30: #{dmdc_forward.1} parent=5 // pred_check_branch
      %180 = sbr.rel (%p177) target = $region32
    $region31: #{dmdc_forward.1} parent=5 // pred_region
      %s181 = ssub.s32 %s9, 1
      %p182 = scmp.lt.s32.totalorder %s18, 1
      %s183 = scalar_select %p182, %s18, 1
      %p184 = scmp.lt.s32.totalorder %s19, 0
      %s185 = scalar_select %p184, %s19, 0
      %s186 = smul.addr %s185, 9
      %s187 = smul.addr %s183, 9
      %s188 = sadd.s32 %s186, %s187
      %s189 = smul.addr %s188, 4
      %s190 = scalar_lea.vmem %s0, %s189
      %p191 = pneg %p49
      %p192 = pneg %p46
      %p193 = scmp.lt.s32.totalorder %s18, 1
      %s194 = scalar_select %p193, %s18, 1
      %s195 = smul.addr %s194, 3
      %s196 = smul.addr %s195, 4
      %s197 = scalar_lea.vmem %s1, %s196
      %p198 = pneg %p75
      %p199 = pneg %p72
      %p200 = scmp.lt.s32.totalorder %s18, 1
      %s201 = scalar_select %p200, %s18, 1
      %s202 = smul.addr %s201, 8
      %s203 = scalar_lea.vmem %s2, %s202
      %p204 = pneg %p101
      %p205 = pneg %p98
      %p206 = pneg %p129
      %p207 = pneg %p126
      %s208 = smul.u32 2, %s19
      %p209 = scmp.lt.s32.totalorder %s18, 1
      %s210 = scalar_select %p209, %s18, 1
      %p211 = scmp.lt.s32.totalorder %s208, 1
      %s212 = scalar_select %p211, %s208, 1
      %s213 = smul.addr %s210, 2
      %s214 = sadd.s32 %s212, %s213
      %s215 = smul.addr %s214, 8
      %s216 = scalar_lea.vmem %s3, %s215
      %p217 = scmp.lt.s32.totalorder %s18, 1
      %s218 = scalar_select %p217, %s18, 1
      %p219 = scmp.lt.s32.totalorder %s19, 0
      %s220 = scalar_select %p219, %s19, 0
      %s221 = smul.addr %s220, 9
      %s222 = smul.addr %s218, 9
      %s223 = sadd.s32 %s221, %s222
      %s224 = smul.addr %s223, 4
      %s225 = scalar_lea.vmem %s0, %s224
      %p226 = scmp.lt.s32.totalorder %s18, 1
      %s227 = scalar_select %p226, %s18, 1
      %s228 = smul.addr %s227, 3
      %s229 = smul.addr %s228, 4
      %s230 = scalar_lea.vmem %s1, %s229
      %p231 = scmp.lt.s32.totalorder %s18, 1
      %s232 = scalar_select %p231, %s18, 1
      %s233 = smul.addr %s232, 8
      %s234 = scalar_lea.vmem %s2, %s233
      %s235 = smul.u32 2, %s19
      %p236 = scmp.lt.s32.totalorder %s18, 1
      %s237 = scalar_select %p236, %s18, 1
      %p238 = scmp.lt.s32.totalorder %s235, 1
      %s239 = scalar_select %p238, %s235, 1
      %s240 = smul.addr %s237, 2
      %s241 = sadd.s32 %s239, %s240
      %s242 = smul.addr %s241, 8
      %s243 = scalar_lea.vmem %s3, %s242
      %s244 = smul.u32 2, %s19
      %v246 = vld [vmem:[%s225] sm:$0xff]
      %v247 = vld [vmem:[%s225 + $0xc] sm:$0xff]
      %v248 = vld [vmem:[%s225 + $0x18] sm:$0xff]
      %v249 = vld [vmem:[%s230] sm:$0xf]
      %v250 = vld [vmem:[%s225 + $0x8] sm:$0xf]
      %v251 = vld [vmem:[%s225 + $0x14] sm:$0xf]
      %v252 = vld [vmem:[%s225 + $0x20] sm:$0xf]
      %s253 = scalar_lea.vmem %s230, 4
      %v254 = vld [vmem:[%s253] sm:$0xf]
      %v261 = vunpack.c.l.b16 %v246
      %v262 = vunpack.c.h.b16 %v246
      %v263 = vunpack.c.l.b16 %v250
      %v264 = vunpack.c.l.b16 %v247
      %v265 = vunpack.c.h.b16 %v247
      %v266 = vunpack.c.l.b16 %v251
      %v267 = vunpack.c.l.b16 %v248
      %v268 = vunpack.c.h.b16 %v248
      %v269 = vunpack.c.l.b16 %v252
      %v270 = vpack.c.b16 %v264, %v261
      %v271 = vpack.c.b16 %v265, %v262
      %v272 = vpack.c.b16 %v266, %v263
      %v273 = vpack.c.b16 %v267, %v267
      %v274 = vpack.c.b16 %v268, %v268
      %v275 = vpack.c.b16 %v269, %v269
      %276 = vrot.lane.b32.xlu0 %v270, 112
      %v277 = vpop.permute.xlu0 %276
      %278 = vrot.lane.b32.xlu0 %v271, 112
      %v279 = vpop.permute.xlu0 %278
      %280 = vrot.lane.b32.xlu0 %v272, 112
      %v281 = vpop.permute.xlu0 %280
      %282 = vrot.lane.b32.xlu0 %v273, 112
      %v283 = vpop.permute.xlu0 %282
      %284 = vrot.lane.b32.xlu0 %v274, 112
      %v285 = vpop.permute.xlu0 %284
      %286 = vrot.lane.b32.xlu0 %v275, 112
      %v287 = vpop.permute.xlu0 %286
      %vm288 = vcmask 916480
      %v289 = vsel %vm288, %v277, %v279
      %v290 = vsel %vm288, %v279, %v281
      %v291 = vsel %vm288, %v283, %v285
      %v292 = vsel %vm288, %v285, %v287
      %vm295 = vcmask 195584
      %v297 = vsel %vm295, %v254, 0
      %vm299 = vcmask 1043456
      %v301 = vsel %vm299, %v291, 0
      %v304 = vsel %vm299, %v292, 0
      %306 = vmatprep.subr.bf16.mxu0 %v290
      %307 = vmatpush1.bf16.msra.mxu0 %v289
      %308 = vmatprep.subr.bf16.mxu0 %v304
      %309 = vmatpush1.bf16.msra.mxu0 %v301
      %310 = vmatprep.subr.bf16.mxu0 0
      %311 = vmatpush1.bf16.msra.mxu0 0
      %312 = vmatprep.subr.bf16.mxu0 0
      %313 = vmatpush1.bf16.msra.mxu0 0
      %314 = vmatprep.subr.bf16.mxu0 0
      %315 = vmatpush1.bf16.msra.mxu0 0
      %316 = vmatprep.subr.bf16.mxu0 0
      %317 = vmatpush1.bf16.msra.mxu0 0
      %318 = vmatprep.subr.bf16.mxu0 0
      %319 = vmatpush1.bf16.msra.mxu0 0
      %320 = vmatprep.subr.bf16.mxu0 0
      %321 = vmatpush1.bf16.msra.mxu0 0
      %322 = vmatprep.subr.bf16.mxu0 0
      %323 = vmatpush1.bf16.msra.mxu0 0
      %324 = vmatprep.subr.bf16.mxu0 0
      %325 = vmatpush1.bf16.msra.mxu0 0
      %326 = vmatprep.subr.bf16.mxu0 0
      %327 = vmatpush1.bf16.msra.mxu0 0
      %328 = vmatprep.subr.bf16.mxu0 0
      %329 = vmatpush1.bf16.msra.mxu0 0
      %330 = vmatprep.subr.bf16.mxu0 0
      %331 = vmatpush1.bf16.msra.mxu0 0
      %332 = vmatprep.subr.bf16.mxu0 0
      %333 = vmatpush1.bf16.msra.mxu0 0
      %334 = vmatprep.subr.bf16.mxu0 0
      %335 = vmatpush1.bf16.msra.mxu0 0
      %336 = vmatprep.subr.bf16.mxu0 0
      %337 = vmatpush1.bf16.msra.mxu0 0
      %338 = vmatprep.mubr.bf16.mxu0 0
      %339 = vmatmul.mubr.bf16.gmra.mrb[0].mxu0 %v297
      %v340 = vpop.f32.mrb[0].mxu0
      %v341 = vadd.f32 0.0, %v340
      %v342 = vpop.f32.mrb[0].mxu0
      %v343 = vadd.f32 0.0, %v342
      %v344 = vpop.f32.mrb[0].mxu0
      %v345 = vpop.f32.mrb[0].mxu0
      %346 = vdwg.mxu0
      %v350 = vsel %vm295, %v249, 0
      %v353 = vsel %vm299, %v273, 0
      %v356 = vsel %vm299, %v274, 0
      %358 = vmatprep.subr.bf16.mxu0 %v271
      %359 = vmatpush1.bf16.msra.mxu0 %v270
      %360 = vmatprep.subr.bf16.mxu0 %v356
      %361 = vmatpush1.bf16.msra.mxu0 %v353
      %362 = vmatprep.subr.bf16.mxu0 0
      %363 = vmatpush1.bf16.msra.mxu0 0
      %364 = vmatprep.subr.bf16.mxu0 0
      %365 = vmatpush1.bf16.msra.mxu0 0
      %366 = vmatprep.subr.bf16.mxu0 0
      %367 = vmatpush1.bf16.msra.mxu0 0
      %368 = vmatprep.subr.bf16.mxu0 0
      %369 = vmatpush1.bf16.msra.mxu0 0
      %370 = vmatprep.subr.bf16.mxu0 0
      %371 = vmatpush1.bf16.msra.mxu0 0
      %372 = vmatprep.subr.bf16.mxu0 0
      %373 = vmatpush1.bf16.msra.mxu0 0
      %374 = vmatprep.subr.bf16.mxu0 0
      %375 = vmatpush1.bf16.msra.mxu0 0
      %376 = vmatprep.subr.bf16.mxu0 0
      %377 = vmatpush1.bf16.msra.mxu0 0
      %378 = vmatprep.subr.bf16.mxu0 0
      %379 = vmatpush1.bf16.msra.mxu0 0
      %380 = vmatprep.subr.bf16.mxu0 0
      %381 = vmatpush1.bf16.msra.mxu0 0
      %382 = vmatprep.subr.bf16.mxu0 0
      %383 = vmatpush1.bf16.msra.mxu0 0
      %384 = vmatprep.subr.bf16.mxu0 0
      %385 = vmatpush1.bf16.msra.mxu0 0
      %386 = vmatprep.subr.bf16.mxu0 0
      %387 = vmatpush1.bf16.msra.mxu0 0
      %388 = vmatprep.subr.bf16.mxu0 0
      %389 = vmatpush1.bf16.msra.mxu0 0
      %390 = vmatprep.mubr.bf16.mxu0 0
      %391 = vmatmul.mubr.bf16.gmra.mrb[0].mxu0 %v350
      %v392 = vpop.f32.mrb[0].mxu0
      %v393 = vadd.f32 %v341, %v392
      %v394 = vpop.f32.mrb[0].mxu0
      %v395 = vadd.f32 %v343, %v394
      %v396 = vpop.f32.mrb[0].mxu0
      %v397 = vpop.f32.mrb[0].mxu0
      %398 = vdwg.mxu0
      %s399 = scalar_lea.vmem %s230, 8
      %v400 = vld [vmem:[%s399] sm:$0xf]
      %401 = vrot.lane.b32.xlu0 %v270, 96
      %v402 = vpop.permute.xlu0 %401
      %403 = vrot.lane.b32.xlu0 %v271, 96
      %v404 = vpop.permute.xlu0 %403
      %405 = vrot.lane.b32.xlu0 %v272, 96
      %v406 = vpop.permute.xlu0 %405
      %407 = vrot.lane.b32.xlu0 %v273, 96
      %v408 = vpop.permute.xlu0 %407
      %409 = vrot.lane.b32.xlu0 %v274, 96
      %v410 = vpop.permute.xlu0 %409
      %411 = vrot.lane.b32.xlu0 %v275, 96
      %v412 = vpop.permute.xlu0 %411
      %vm413 = vcmask 785408
      %v414 = vsel %vm413, %v402, %v404
      %v415 = vsel %vm413, %v404, %v406
      %v416 = vsel %vm413, %v408, %v410
      %v417 = vsel %vm413, %v410, %v412
      %v421 = vsel %vm295, %v400, 0
      %v424 = vsel %vm299, %v416, 0
      %v427 = vsel %vm299, %v417, 0
      %429 = vmatprep.subr.bf16.mxu0 %v415
      %430 = vmatpush1.bf16.msra.mxu0 %v414
      %431 = vmatprep.subr.bf16.mxu0 %v427
      %432 = vmatpush1.bf16.msra.mxu0 %v424
      %433 = vmatprep.subr.bf16.mxu0 0
      %434 = vmatpush1.bf16.msra.mxu0 0
      %435 = vmatprep.subr.bf16.mxu0 0
      %436 = vmatpush1.bf16.msra.mxu0 0
      %437 = vmatprep.subr.bf16.mxu0 0
      %438 = vmatpush1.bf16.msra.mxu0 0
      %439 = vmatprep.subr.bf16.mxu0 0
      %440 = vmatpush1.bf16.msra.mxu0 0
      %441 = vmatprep.subr.bf16.mxu0 0
      %442 = vmatpush1.bf16.msra.mxu0 0
      %443 = vmatprep.subr.bf16.mxu0 0
      %444 = vmatpush1.bf16.msra.mxu0 0
      %445 = vmatprep.subr.bf16.mxu0 0
      %446 = vmatpush1.bf16.msra.mxu0 0
      %447 = vmatprep.subr.bf16.mxu0 0
      %448 = vmatpush1.bf16.msra.mxu0 0
      %449 = vmatprep.subr.bf16.mxu0 0
      %450 = vmatpush1.bf16.msra.mxu0 0
      %451 = vmatprep.subr.bf16.mxu0 0
      %452 = vmatpush1.bf16.msra.mxu0 0
      %453 = vmatprep.subr.bf16.mxu0 0
      %454 = vmatpush1.bf16.msra.mxu0 0
      %455 = vmatprep.subr.bf16.mxu0 0
      %456 = vmatpush1.bf16.msra.mxu0 0
      %457 = vmatprep.subr.bf16.mxu0 0
      %458 = vmatpush1.bf16.msra.mxu0 0
      %459 = vmatprep.subr.bf16.mxu0 0
      %460 = vmatpush1.bf16.msra.mxu0 0
      %461 = vmatprep.mubr.bf16.mxu0 0
      %462 = vmatmul.mubr.bf16.gmra.mrb[0].mxu0 %v421
      %v463 = vpop.f32.mrb[0].mxu0
      %v464 = vadd.f32 0.0, %v463
      %v465 = vpop.f32.mrb[0].mxu0
      %v466 = vadd.f32 0.0, %v465
      %v467 = vpop.f32.mrb[0].mxu0
      %v468 = vpop.f32.mrb[0].mxu0
      %469 = vdwg.mxu0
      %v470 = vadd.f32 %v393, %v464
      %v471 = vadd.f32 %v395, %v466
      %v472 = vld [vmem:[%s234] sm:$0xff]
      %474 = vset.pattern.permute.xlu0 0
      %475 = vperm.xlu0 %474, %v472
      %v476 = vpop.permute.xlu0 %475
      %v478 = vadd.f32 %v470, %v476
      %v479 = vadd.f32 %v471, %v476
      %480 = vst [vmem:[%s243] sm:$0xff] %v478
      %481 = vst [vmem:[%s243 + $0x8] sm:$0xff] %v479
      %s482 = smul.u32 2, %s19
      %p483 = scmp.lt.s32.totalorder %s18, 1
      %s484 = scalar_select %p483, %s18, 1
      %p485 = scmp.lt.s32.totalorder %s482, 1
      %s486 = scalar_select %p485, %s482, 1
      %s487 = smul.addr %s484, 2
      %s488 = sadd.s32 %s486, %s487
      %s489 = smul.addr %s488, 8
      %s490 = scalar_lea.vmem %s3, %s489
      // Predicated region
      $region33: #{dmdc_forward.1} parent=31 // pred_check
        %p491 = pneg %p126
      $region34: #{dmdc_forward.1} parent=31 // pred_check_branch
        %493 = sbr.rel (%p491) target = $region36
      $region35: #{dmdc_forward.1} parent=31 // pred_region
        %s494 = smul.u32 2, %s19
      $region36: #{dmdc_forward.1} parent=31 // pred_fallthru
        _
    $region32: #{dmdc_forward.1} parent=5 // pred_fallthru
      _
    %p495 = scmp.le.s32.totalorder 2, %s9
    // Predicated region
    $region37: #{dmdc_forward.1} parent=5 // pred_check
      %p496 = pneg %p495
    $region38: #{dmdc_forward.1} parent=5 // pred_check_branch
      %498 = sbr.rel (%p496) target = $region40
    $region39: #{dmdc_forward.1} parent=5 // pred_region
      %s499 = ssub.s32 %s9, 2
      // Predicated region
      $region41: #{dmdc_forward.1} parent=39 // pred_check
        %p500 = pneg %p132
      $region42: #{dmdc_forward.1} parent=39 // pred_check_branch
        %502 = sbr.rel (%p500) target = $region44
      $region43: #{dmdc_forward.1} parent=39 // pred_region
        %s503 = smul.u32 2, %s21
        %p504 = scmp.lt.s32.totalorder %s20, 1
        %s505 = scalar_select %p504, %s20, 1
        %p506 = scmp.lt.s32.totalorder %s503, 1
        %s507 = scalar_select %p506, %s503, 1
        %s508 = smul.addr %s505, 2
        %s509 = sadd.s32 %s507, %s508
        %s510 = smul.addr %s509, 8
        %s511 = scalar_lea.vmem %s3, %s510
      $region44: #{dmdc_forward.1} parent=39 // pred_fallthru
        _
    $region40: #{dmdc_forward.1} parent=5 // pred_fallthru
      _
  $region6: #{dmdc_forward.1} parent=0 // loop_footer
    %s13 = sadd.s32 1, %s9
  $region7: #{dmdc_forward.1} parent=0 // loop_footer_branch
    %8 = sbr.rel target = $region3
  $region8: #{dmdc_forward.1} parent=0 // loop_exit
    _

</llo_original>
